<compile_context>
chip_gen: v7x
topology: tpu7x:2x2x1
jax: 0.10.0
libtpu: 0.0.40
codegen_flags: <defaults>
</compile_context>

<pallas_src>
import functools

import jax
import jax.numpy as jnp
from jax.experimental import pallas as pl
from jax.experimental.pallas import tpu as pltpu


def _mlc_kernel(feat_ref, w1a_ref, w1b_ref, b1_ref, w2_ref, b2_ref, y_ref,
                logits_ref, bce_ref, *, n_valid, k_valid, tile_n, k_pad, ragged):
    # feat tile: (TN, C, HW) f32 (no widening temp; pooling runs in f32 directly).
    feat = feat_ref[...]
    hw = feat.shape[-1]
    avg = jnp.sum(feat, axis=-1) * (1.0 / hw)            # (TN, C) AdaptiveAvgPool2d(1)
    mx = jnp.max(feat, axis=-1)                          # (TN, C) AdaptiveMaxPool2d(1)

    # cat([avg, max], 1) @ W1  ==  avg @ W1[:C] + max @ W1[C:]   (no concat/relayout)
    h = (jnp.dot(avg, w1a_ref[...], preferred_element_type=jnp.float32)
         + jnp.dot(mx, w1b_ref[...], preferred_element_type=jnp.float32)
         + b1_ref[...])                                  # (TN, 512)
    h = jnp.maximum(h, 0.0)                              # ReLU (Dropouts = identity)
    logits = (jnp.dot(h, w2_ref[...], preferred_element_type=jnp.float32)
              + b2_ref[...])                             # (TN, K_pad) f32
    logits_ref[...] = logits                             # OOB rows masked by Pallas

    # binary_cross_entropy_with_logits (numerically stable); padding masked with a
    # select (NaN-safe: garbage rows from a ragged last block never reach the sum).
    y = y_ref[...].astype(jnp.float32)                   # bf16 0/1 -> exact f32
    bce = (jnp.maximum(logits, 0.0) - logits * y
           + jnp.log1p(jnp.exp(-jnp.abs(logits))))

    if (k_valid == k_pad) and not ragged:
        masked = bce                                     # nothing to mask (static)
    else:
        valid = jax.lax.broadcasted_iota(jnp.int32, (tile_n, k_pad), 1) < k_valid
        if ragged:
            row = (pl.program_id(0) * tile_n
                   + jax.lax.broadcasted_iota(jnp.int32, (tile_n, k_pad), 0))
            valid = valid & (row < n_valid)
        masked = jnp.where(valid, bce, 0.0)
    # per-tile partial reduction: (1, K_pad) lane partials; wrapper sums them.
    bce_ref[...] = jnp.sum(masked, axis=0, keepdims=True)


def multi_label_classifier_forward(features, y_multi_hot, params):
    """features: (N, C, H, W) f32; y_multi_hot: (N, K) f32; params: dict of weights.

    Returns (logits (N, K) f32, {"mulbl_cls_loss": scalar}).
    """
    N, C, H, W = features.shape
    HW = H * W
    hidden = params["w1"].shape[1]
    K = params["w2"].shape[1]
    K_pad = ((K + 127) // 128) * 128                     # lane-dense output width

    feat = features.reshape(N, C, HW)                    # free reshape, stays f32

    # Batch tile: multiple of 8 (when tiling), <= ~12 MiB per buffer, cap 512 rows.
    row_bytes = C * HW * 4
    tile_n = max(8, min(512, (12 * 1024 * 1024 // row_bytes) // 8 * 8))
    if tile_n >= N:
        if N >= 16:
            # keep >= 2 grid steps so the "parallel" axis feeds both TCs on v7x
            tile_n = (((N + 1) // 2) + 7) // 8 * 8
        else:
            tile_n = N                                   # single full-batch tile
    num_tiles = pl.cdiv(N, tile_n)
    ragged = (N % tile_n) != 0

    # Weights / biases stay f32 (tiny, resident); y ships as bf16 (0/1 exact).
    w1 = params["w1"].astype(jnp.float32)
    w1a, w1b = w1[:C], w1[C:]                            # split-matmul halves
    b1 = params["b1"].reshape(1, hidden).astype(jnp.float32)
    w2 = params["w2"].astype(jnp.float32)
    b2 = params["b2"].reshape(1, K).astype(jnp.float32)
    y = y_multi_hot.astype(jnp.bfloat16)
    if K_pad != K:
        w2 = jnp.pad(w2, ((0, 0), (0, K_pad - K)))
        b2 = jnp.pad(b2, ((0, 0), (0, K_pad - K)))
        y = jnp.pad(y, ((0, 0), (0, K_pad - K)))

    kernel = functools.partial(_mlc_kernel, n_valid=N, k_valid=K,
                               tile_n=tile_n, k_pad=K_pad, ragged=ragged)

    cost = pl.CostEstimate(
        flops=int(2 * N * (C * HW + 2 * C * hidden + hidden * K_pad)),
        transcendentals=int(2 * N * K_pad),
        bytes_accessed=int(feat.size * 4
                           + (w1a.size + w1b.size + b1.size + w2.size + b2.size) * 4
                           + y.size * 2
                           + N * K_pad * 4 + num_tiles * K_pad * 4),
    )

    logits_pad, bce_part = pl.pallas_call(
        kernel,
        out_shape=(
            jax.ShapeDtypeStruct((N, K_pad), jnp.float32),        # logits (col-padded)
            jax.ShapeDtypeStruct((num_tiles, K_pad), jnp.float32),  # per-tile BCE partials
        ),
        grid=(num_tiles,),
        in_specs=[
            pl.BlockSpec((tile_n, C, HW), lambda i: (i, 0, 0)),   # feat (pipelined)
            pl.BlockSpec((C, hidden), lambda i: (0, 0)),          # w1[:C] (resident)
            pl.BlockSpec((C, hidden), lambda i: (0, 0)),          # w1[C:] (resident)
            pl.BlockSpec((1, hidden), lambda i: (0, 0)),          # b1
            pl.BlockSpec((hidden, K_pad), lambda i: (0, 0)),      # w2 (resident)
            pl.BlockSpec((1, K_pad), lambda i: (0, 0)),           # b2
            pl.BlockSpec((tile_n, K_pad), lambda i: (i, 0)),      # y (bf16)
        ],
        out_specs=(
            pl.BlockSpec((tile_n, K_pad), lambda i: (i, 0)),
            pl.BlockSpec((1, K_pad), lambda i: (i, 0)),
        ),
        compiler_params=pltpu.CompilerParams(
            dimension_semantics=("parallel",),                    # v7x: shard over 2 TCs
            vmem_limit_bytes=48 * 1024 * 1024),
        cost_estimate=cost,
    )(feat, w1a, w1b, b1, w2, b2, y)

    logits = logits_pad[:, :K]
    loss = jnp.sum(bce_part) / (N * K)                   # BCEWithLogits, reduction='mean'
    return logits, {"mulbl_cls_loss": loss}


def init_params(key, in_channels, num_classes, hidden=512):
    """Deterministic init matching weights_init: Linear weight ~ N(0, 0.01), bias = 0."""
    k1, k2 = jax.random.split(key)
    w1 = 0.01 * jax.random.normal(k1, (2 * in_channels, hidden), jnp.float32)
    b1 = jnp.zeros((1, hidden), jnp.float32)
    w2 = 0.01 * jax.random.normal(k2, (hidden, num_classes), jnp.float32)
    b2 = jnp.zeros((1, num_classes), jnp.float32)
    return {"w1": w1, "b1": b1, "w2": w2, "b2": b2}


def build_multi_hot(targets, num_classes):
    """Glue for the Python loop over `targets` (list of lists of class indices)."""
    N = len(targets)
    y = jnp.zeros((N, num_classes), jnp.float32)
    for i, idxs in enumerate(targets):
        for o in idxs:
            y = y.at[i, o].set(1.0)
    return y


def _reference_forward(features, y, params):
    """Pure-JAX reference (matches the PyTorch eval-mode forward)."""
    avg = jnp.mean(features, axis=(2, 3))
    mx = jnp.max(features, axis=(2, 3))
    x = jnp.concatenate([avg, mx], axis=1)
    h = jnp.maximum(x @ params["w1"] + params["b1"].reshape(1, -1), 0.0)
    logits = h @ params["w2"] + params["b2"].reshape(1, -1)
    bce = (jnp.maximum(logits, 0.0) - logits * y
           + jnp.log1p(jnp.exp(-jnp.abs(logits))))
    return logits, jnp.mean(bce)


if __name__ == "__main__":
    # Small, cfg-consistent shapes: in_channels = FPN.OUT_CHANNELS, K = NUM_CLASSES
    N, C, H, W = 2, 32, 16, 16
    NUM_CLASSES = 8

    key = jax.random.PRNGKey(0)
    kf, kp = jax.random.split(key)
    features = jax.random.normal(kf, (N, C, H, W), jnp.float32)
    params = init_params(kp, in_channels=C, num_classes=NUM_CLASSES)

    # synthetic image-level multi-label targets (list of class-index lists)
    targets = [[0, 3], [2, 5, 7]]
    y = build_multi_hot(targets, NUM_CLASSES)

    logits, loss_dict = multi_label_classifier_forward(features, y, params)
    jax.block_until_ready((logits, loss_dict["mulbl_cls_loss"]))

    assert logits.shape == (N, NUM_CLASSES)
    assert loss_dict["mulbl_cls_loss"].shape == ()
    assert bool(jnp.isfinite(loss_dict["mulbl_cls_loss"]))

    ref_logits, ref_loss = _reference_forward(features, y, params)
    assert jnp.allclose(logits, ref_logits, rtol=5e-2, atol=5e-3)
    assert jnp.allclose(loss_dict["mulbl_cls_loss"], ref_loss, rtol=5e-2, atol=5e-3)

    print("KERNEL_OK")
</pallas_src>

<mosaic_0001>
module attributes {stable_mosaic.version = 11 : i64} {
  func.func @_mlc_kernel(%arg0: i32, %arg1: memref<2x32x256xf32, #tpu.memory_space<vmem>>, %arg2: memref<32x512xf32, #tpu.memory_space<vmem>>, %arg3: memref<32x512xf32, #tpu.memory_space<vmem>>, %arg4: memref<1x512xf32, #tpu.memory_space<vmem>>, %arg5: memref<512x128xf32, #tpu.memory_space<vmem>>, %arg6: memref<1x128xf32, #tpu.memory_space<vmem>>, %arg7: memref<2x128xbf16, #tpu.memory_space<vmem>>, %arg8: memref<2x128xf32, #tpu.memory_space<vmem>>, %arg9: memref<1x128xf32, #tpu.memory_space<vmem>>) attributes {dimension_semantics = [#tpu.dimension_semantics<parallel>], iteration_bounds = array<i64: 1>, scalar_prefetch = 0 : i64, scratch_operands = 0 : i64, tpu.core_type = #tpu.core_type<tc>, window_params = [{transform_indices = @transform_0, window_bounds = array<i64: 2, 32, 256>}, {pipeline_mode = #tpu.pipeline_mode<synchronous>, transform_indices = @transform_1, window_bounds = array<i64: 32, 512>}, {pipeline_mode = #tpu.pipeline_mode<synchronous>, transform_indices = @transform_2, window_bounds = array<i64: 32, 512>}, {pipeline_mode = #tpu.pipeline_mode<synchronous>, transform_indices = @transform_3, window_bounds = array<i64: 1, 512>}, {pipeline_mode = #tpu.pipeline_mode<synchronous>, transform_indices = @transform_4, window_bounds = array<i64: 512, 128>}, {pipeline_mode = #tpu.pipeline_mode<synchronous>, transform_indices = @transform_5, window_bounds = array<i64: 1, 128>}, {transform_indices = @transform_6, window_bounds = array<i64: 2, 128>}, {transform_indices = @transform_7, window_bounds = array<i64: 2, 128>}, {transform_indices = @transform_8, window_bounds = array<i64: 1, 128>}]} {
    %c0 = arith.constant 0 : index
    %c0_0 = arith.constant 0 : index
    %c0_1 = arith.constant 0 : index
    %0 = vector.load %arg1[%c0, %c0_0, %c0_1] : memref<2x32x256xf32, #tpu.memory_space<vmem>>, vector<2x32x256xf32>
    %cst = arith.constant dense<0.000000e+00> : vector<2x32xf32>
    %1 = vector.multi_reduction <add>, %0, %cst [2] : vector<2x32x256xf32> to vector<2x32xf32>
    %cst_2 = arith.constant 3.906250e-03 : f32
    %2 = vector.broadcast %cst_2 : f32 to vector<2x32xf32>
    %3 = arith.mulf %1, %2 : vector<2x32xf32>
    %cst_3 = arith.constant dense<0xFF800000> : vector<2x32xf32>
    %4 = vector.multi_reduction <maximumf>, %0, %cst_3 [2] : vector<2x32x256xf32> to vector<2x32xf32>
    %c0_4 = arith.constant 0 : index
    %c0_5 = arith.constant 0 : index
    %5 = vector.load %arg2[%c0_4, %c0_5] : memref<32x512xf32, #tpu.memory_space<vmem>>, vector<32x512xf32>
    %cst_6 = arith.constant dense<0.000000e+00> : vector<2x512xf32>
    %6 = tpu.matmul %3, %5, %cst_6 {dimension_numbers = #tpu.dot_dimension_numbers<[1], [0], [0], [1], [0, 0, 1, 1], [], []>} : vector<2x32xf32>, vector<32x512xf32>, vector<2x512xf32> -> vector<2x512xf32>
    %c0_7 = arith.constant 0 : index
    %c0_8 = arith.constant 0 : index
    %7 = vector.load %arg3[%c0_7, %c0_8] : memref<32x512xf32, #tpu.memory_space<vmem>>, vector<32x512xf32>
    %cst_9 = arith.constant dense<0.000000e+00> : vector<2x512xf32>
    %8 = tpu.matmul %4, %7, %cst_9 {dimension_numbers = #tpu.dot_dimension_numbers<[1], [0], [0], [1], [0, 0, 1, 1], [], []>} : vector<2x32xf32>, vector<32x512xf32>, vector<2x512xf32> -> vector<2x512xf32>
    %9 = arith.addf %6, %8 : vector<2x512xf32>
    %c0_10 = arith.constant 0 : index
    %c0_11 = arith.constant 0 : index
    %10 = vector.load %arg4[%c0_10, %c0_11] : memref<1x512xf32, #tpu.memory_space<vmem>>, vector<1x512xf32>
    %11 = vector.broadcast %10 : vector<1x512xf32> to vector<2x512xf32>
    %12 = arith.addf %9, %11 : vector<2x512xf32>
    %cst_12 = arith.constant 0.000000e+00 : f32
    %13 = vector.broadcast %cst_12 : f32 to vector<2x512xf32>
    %14 = arith.maximumf %12, %13 : vector<2x512xf32>
    %c0_13 = arith.constant 0 : index
    %c0_14 = arith.constant 0 : index
    %15 = vector.load %arg5[%c0_13, %c0_14] : memref<512x128xf32, #tpu.memory_space<vmem>>, vector<512x128xf32>
    %cst_15 = arith.constant dense<0.000000e+00> : vector<2x128xf32>
    %16 = tpu.matmul %14, %15, %cst_15 {dimension_numbers = #tpu.dot_dimension_numbers<[1], [0], [0], [1], [0, 0, 1, 1], [], []>} : vector<2x512xf32>, vector<512x128xf32>, vector<2x128xf32> -> vector<2x128xf32>
    %c0_16 = arith.constant 0 : index
    %c0_17 = arith.constant 0 : index
    %17 = vector.load %arg6[%c0_16, %c0_17] : memref<1x128xf32, #tpu.memory_space<vmem>>, vector<1x128xf32>
    %18 = vector.broadcast %17 : vector<1x128xf32> to vector<2x128xf32>
    %19 = arith.addf %16, %18 : vector<2x128xf32>
    %c0_18 = arith.constant 0 : index
    %c0_19 = arith.constant 0 : index
    %20 = vector.load %arg8[%c0_18, %c0_19] : memref<2x128xf32, #tpu.memory_space<vmem>>, vector<2x128xf32>
    tpu.vector_store %arg8[%c0_18, %c0_19], %19 {strides = array<i32>} : memref<2x128xf32, #tpu.memory_space<vmem>>, vector<2x128xf32>,
    %c0_20 = arith.constant 0 : index
    %c0_21 = arith.constant 0 : index
    %21 = vector.load %arg7[%c0_20, %c0_21] : memref<2x128xbf16, #tpu.memory_space<vmem>>, vector<2x128xbf16>
    %22 = arith.extf %21 : vector<2x128xbf16> to vector<2x128xf32>
    %cst_22 = arith.constant 0.000000e+00 : f32
    %23 = vector.broadcast %cst_22 : f32 to vector<2x128xf32>
    %24 = arith.maximumf %19, %23 : vector<2x128xf32>
    %25 = arith.mulf %19, %22 : vector<2x128xf32>
    %26 = arith.subf %24, %25 : vector<2x128xf32>
    %27 = math.absf %19 : vector<2x128xf32>
    %cst_23 = arith.constant 0.000000e+00 : f32
    %28 = vector.broadcast %cst_23 : f32 to vector<2x128xf32>
    %29 = arith.subf %28, %27 : vector<2x128xf32>
    %30 = math.exp %29 : vector<2x128xf32>
    %31 = math.log1p %30 : vector<2x128xf32>
    %32 = arith.addf %26, %31 : vector<2x128xf32>
    %33 = tpu.iota {dimensions = array<i32: 1>} : vector<2x128xi32>
    %c8_i32 = arith.constant 8 : i32
    %34 = vector.broadcast %c8_i32 : i32 to vector<2x128xi32>
    %35 = arith.cmpi slt, %33, %34 : vector<2x128xi32>
    %cst_24 = arith.constant 0.000000e+00 : f32
    %36 = vector.broadcast %cst_24 : f32 to vector<2x128xf32>
    %37 = arith.select %35, %32, %36 : vector<2x128xi1>, vector<2x128xf32>
    %cst_25 = arith.constant dense<0.000000e+00> : vector<128xf32>
    %38 = vector.multi_reduction <add>, %37, %cst_25 [0] : vector<2x128xf32> to vector<128xf32>
    %39 = vector.shape_cast %38 : vector<128xf32> to vector<1x128xf32>
    %c0_26 = arith.constant 0 : index
    %c0_27 = arith.constant 0 : index
    %40 = vector.load %arg9[%c0_26, %c0_27] : memref<1x128xf32, #tpu.memory_space<vmem>>, vector<1x128xf32>
    tpu.vector_store %arg9[%c0_26, %c0_27], %39 {strides = array<i32>} : memref<1x128xf32, #tpu.memory_space<vmem>>, vector<1x128xf32>,
    return
  }
  func.func @transform_0(%arg0: i32) -> (i32, i32, i32) {
    %c0_i32 = arith.constant 0 : i32
    %c0_i32_0 = arith.constant 0 : i32
    %c0_i32_1 = arith.constant 0 : i32
    return %arg0, %c0_i32, %c0_i32_0 : i32, i32, i32
  }
  func.func @transform_1(%arg0: i32) -> (i32, i32) {
    %c0_i32 = arith.constant 0 : i32
    %c0_i32_0 = arith.constant 0 : i32
    %c0_i32_1 = arith.constant 0 : i32
    return %c0_i32, %c0_i32_0 : i32, i32
  }
  func.func @transform_2(%arg0: i32) -> (i32, i32) {
    %c0_i32 = arith.constant 0 : i32
    %c0_i32_0 = arith.constant 0 : i32
    %c0_i32_1 = arith.constant 0 : i32
    return %c0_i32, %c0_i32_0 : i32, i32
  }
  func.func @transform_3(%arg0: i32) -> (i32, i32) {
    %c0_i32 = arith.constant 0 : i32
    %c0_i32_0 = arith.constant 0 : i32
    %c0_i32_1 = arith.constant 0 : i32
    return %c0_i32, %c0_i32_0 : i32, i32
  }
  func.func @transform_4(%arg0: i32) -> (i32, i32) {
    %c0_i32 = arith.constant 0 : i32
    %c0_i32_0 = arith.constant 0 : i32
    %c0_i32_1 = arith.constant 0 : i32
    return %c0_i32, %c0_i32_0 : i32, i32
  }
  func.func @transform_5(%arg0: i32) -> (i32, i32) {
    %c0_i32 = arith.constant 0 : i32
    %c0_i32_0 = arith.constant 0 : i32
    %c0_i32_1 = arith.constant 0 : i32
    return %c0_i32, %c0_i32_0 : i32, i32
  }
  func.func @transform_6(%arg0: i32) -> (i32, i32) {
    %c0_i32 = arith.constant 0 : i32
    %c0_i32_0 = arith.constant 0 : i32
    return %arg0, %c0_i32 : i32, i32
  }
  func.func @transform_7(%arg0: i32) -> (i32, i32) {
    %c0_i32 = arith.constant 0 : i32
    %c0_i32_0 = arith.constant 0 : i32
    return %arg0, %c0_i32 : i32, i32
  }
  func.func @transform_8(%arg0: i32) -> (i32, i32) {
    %c0_i32 = arith.constant 0 : i32
    %c0_i32_0 = arith.constant 0 : i32
    return %arg0, %c0_i32 : i32, i32
  }
}

</mosaic_0001>

<llo_original>
// kernel: tpu_custom_call.1
$region0: #{tpu_custom_call.1}
  #allocation0 [shape = 'u32[]', space=smem, size = 0x4, offset = 0x4, fixed_abs, tag = 'smem constant byte address 0x4 - core index']
  #allocation1 [shape = 'u32[144,128]{1,0:T(1,128)}', space=vmem, size = 0x12000, scoped, tag = 'internal scratch']
  %s0 = inlined_call_operand.hbm [shape: f32[2,32,256], index: 0, kind: input, shape index: {}]
  %s1 = inlined_call_operand.hbm [shape: f32[32,512], index: 1, kind: input, shape index: {}]
  %s2 = inlined_call_operand.hbm [shape: f32[32,512], index: 2, kind: input, shape index: {}]
  %s3 = inlined_call_operand.vmem [shape: f32[1,512], index: 3, kind: input, shape index: {}]
  %s4 = inlined_call_operand.hbm [shape: f32[512,128], index: 4, kind: input, shape index: {}]
  %s5 = inlined_call_operand.vmem [shape: f32[1,128], index: 5, kind: input, shape index: {}]
  %s6 = inlined_call_operand.vmem [shape: bf16[2,128], index: 6, kind: input, shape index: {}]
  %s7 = inlined_call_operand.hbm [shape: f32[2,128], index: 7, kind: output, shape index: {0}]
  %s8 = inlined_call_operand.hbm [shape: f32[1,128], index: 8, kind: output, shape index: {1}]
  %9 = xla_tuple %s7, %s8
  %s10 = sld [smem:[#allocation0]]
  $region62: #{tpu_custom_call.1} parent=0
    _
  %s12 = ssub.s32 1, %s10
  %s13 = scalar_select 0, %s12, %s10
  $region1: #{tpu_custom_call.1} parent=0
    #allocation2 [shape = 'u8[65536]{0}', space=vmem, size = 0x10000, scoped, tag = 'input window, operand 0, single buffered']
    #allocation3 [shape = 's32[1]{0}', space=sflag, size = 0x4, scoped, tag = 'scoped memory for tpu_custom_call.1']
    #allocation4 [shape = 's32[1]{0}', space=sflag, size = 0x4, scoped, tag = 'scoped memory for tpu_custom_call.1']
    #allocation5 [shape = 'u8[65536]{0}', space=vmem, size = 0x10000, scoped, tag = 'input window, operand 1, single buffered']
    #allocation6 [shape = 's32[1]{0}', space=sflag, size = 0x4, scoped, tag = 'scoped memory for tpu_custom_call.1']
    #allocation7 [shape = 'u8[65536]{0}', space=vmem, size = 0x10000, scoped, tag = 'input window, operand 2, single buffered']
    #allocation8 [shape = 'u8[262144]{0}', space=vmem, size = 0x40000, scoped, tag = 'input window, operand 4, single buffered']
    #allocation9 [shape = 's32[1]{0}', space=sflag, size = 0x4, scoped, tag = 'scoped memory for tpu_custom_call.1']
    #allocation10 [shape = 'u8[1024]{0}', space=vmem, size = 0x400, scoped, tag = 'output window, operand 0, single buffered']
    #allocation11 [shape = 'u8[512]{0}', space=vmem, size = 0x400, scoped, tag = 'output window, operand 1, single buffered']
    #allocation12 [shape = 's32[1]{0}', space=sflag, size = 0x4, scoped, tag = 'scoped memory for tpu_custom_call.1']
    %14 = vsyncpa [#allocation3], 0
    %15 = vsyncpa [#allocation6], 0
    %16 = vsyncpa [#allocation9], 0
    %17 = vsyncpa [#allocation4], 0
    %18 = vsyncpa [#allocation12], 0
    // Predicated region
    $region2: #{tpu_custom_call.1} parent=1 // pred_check
      _
    $region3: #{tpu_custom_call.1} parent=1 // pred_check_branch
      %20 = sbr.rel (0) target = $region5
    $region4: #{tpu_custom_call.1} parent=1 // pred_region
      %s22 = ssub.s32 2048, 2048
      %23 = vsyncadd [#allocation3], %s22
      %s24 = sshll.u32 [#allocation2], 4
      %s25 = int_to_ptr.vmem [resolvable:$true] %s24
      %30 = dma.hbm_to_vmem [thread:$0]  %s0, 2048, %s25, [#allocation3], 256, 256, 16
    $region5: #{tpu_custom_call.1} parent=1 // pred_fallthru
      _
    // Predicated region
    $region6: #{tpu_custom_call.1} parent=1 // pred_check
      _
    $region7: #{tpu_custom_call.1} parent=1 // pred_check_branch
      %32 = sbr.rel (0) target = $region9
    $region8: #{tpu_custom_call.1} parent=1 // pred_region
      %s34 = ssub.s32 2048, 2048
      %35 = vsyncadd [#allocation6], %s34
      %s36 = sshll.u32 [#allocation5], 4
      %s37 = int_to_ptr.vmem [resolvable:$true] %s36
      %42 = dma.hbm_to_vmem [thread:$0]  %s1, 2048, %s37, [#allocation6], 512, 512, 32
    $region9: #{tpu_custom_call.1} parent=1 // pred_fallthru
      _
    // Predicated region
    $region10: #{tpu_custom_call.1} parent=1 // pred_check
      _
    $region11: #{tpu_custom_call.1} parent=1 // pred_check_branch
      %44 = sbr.rel (0) target = $region13
    $region12: #{tpu_custom_call.1} parent=1 // pred_region
      %s46 = ssub.s32 2048, 2048
      %47 = vsyncadd [#allocation6], %s46
      %s48 = sshll.u32 [#allocation7], 4
      %s49 = int_to_ptr.vmem [resolvable:$true] %s48
      %54 = dma.hbm_to_vmem [thread:$0]  %s2, 2048, %s49, [#allocation6], 512, 512, 32
    $region13: #{tpu_custom_call.1} parent=1 // pred_fallthru
      _
    // Predicated region
    $region14: #{tpu_custom_call.1} parent=1 // pred_check
      _
    $region15: #{tpu_custom_call.1} parent=1 // pred_check_branch
      %56 = sbr.rel (0) target = $region17
    $region16: #{tpu_custom_call.1} parent=1 // pred_region
      _
    $region17: #{tpu_custom_call.1} parent=1 // pred_fallthru
      _
    // Predicated region
    $region18: #{tpu_custom_call.1} parent=1 // pred_check
      _
    $region19: #{tpu_custom_call.1} parent=1 // pred_check_branch
      %58 = sbr.rel (0) target = $region21
    $region20: #{tpu_custom_call.1} parent=1 // pred_region
      %s60 = ssub.s32 8192, 8192
      %61 = vsyncadd [#allocation9], %s60
      %s62 = sshll.u32 [#allocation8], 4
      %s63 = int_to_ptr.vmem [resolvable:$true] %s62
      %68 = dma.hbm_to_vmem [thread:$0]  %s4, 8192, %s63, [#allocation9], 128, 128, 8
    $region21: #{tpu_custom_call.1} parent=1 // pred_fallthru
      _
    // Predicated region
    $region22: #{tpu_custom_call.1} parent=1 // pred_check
      _
    $region23: #{tpu_custom_call.1} parent=1 // pred_check_branch
      %70 = sbr.rel (0) target = $region25
    $region24: #{tpu_custom_call.1} parent=1 // pred_region
      _
    $region25: #{tpu_custom_call.1} parent=1 // pred_fallthru
      _
    // Predicated region
    $region26: #{tpu_custom_call.1} parent=1 // pred_check
      _
    $region27: #{tpu_custom_call.1} parent=1 // pred_check_branch
      %72 = sbr.rel (0) target = $region29
    $region28: #{tpu_custom_call.1} parent=1 // pred_region
      _
    $region29: #{tpu_custom_call.1} parent=1 // pred_fallthru
      _
    // Predicated region
    $region30: #{tpu_custom_call.1} parent=1 // pred_check
      _
    $region31: #{tpu_custom_call.1} parent=1 // pred_check_branch
      %74 = sbr.rel (0) target = $region33
    $region32: #{tpu_custom_call.1} parent=1 // pred_region
      %75 = dma.done [#allocation3], 2048
    $region33: #{tpu_custom_call.1} parent=1 // pred_fallthru
      _
    // Predicated region
    $region34: #{tpu_custom_call.1} parent=1 // pred_check
      _
    $region35: #{tpu_custom_call.1} parent=1 // pred_check_branch
      %77 = sbr.rel (0) target = $region37
    $region36: #{tpu_custom_call.1} parent=1 // pred_region
      %78 = dma.done [#allocation6], 2048
    $region37: #{tpu_custom_call.1} parent=1 // pred_fallthru
      _
    // Predicated region
    $region38: #{tpu_custom_call.1} parent=1 // pred_check
      _
    $region39: #{tpu_custom_call.1} parent=1 // pred_check_branch
      %80 = sbr.rel (0) target = $region41
    $region40: #{tpu_custom_call.1} parent=1 // pred_region
      %81 = dma.done [#allocation6], 2048
    $region41: #{tpu_custom_call.1} parent=1 // pred_fallthru
      _
    // Predicated region
    $region42: #{tpu_custom_call.1} parent=1 // pred_check
      _
    $region43: #{tpu_custom_call.1} parent=1 // pred_check_branch
      %83 = sbr.rel (0) target = $region45
    $region44: #{tpu_custom_call.1} parent=1 // pred_region
      %84 = dma.done [#allocation9], 8192
    $region45: #{tpu_custom_call.1} parent=1 // pred_fallthru
      _
    %v85 = vld [vmem:[#allocation2] sm:$0xff]
    %v86 = vld [vmem:[#allocation2 + $0x8] sm:$0xff]
    %v87 = vld [vmem:[#allocation2 + $0x10] sm:$0xff]
    %v88 = vld [vmem:[#allocation2 + $0x18] sm:$0xff]
    %v89 = vld [vmem:[#allocation2 + $0x20] sm:$0xff]
    %v90 = vld [vmem:[#allocation2 + $0x28] sm:$0xff]
    %v91 = vld [vmem:[#allocation2 + $0x30] sm:$0xff]
    %v92 = vld [vmem:[#allocation2 + $0x38] sm:$0xff]
    %v93 = vld [vmem:[#allocation2 + $0x40] sm:$0xff]
    %v94 = vld [vmem:[#allocation2 + $0x48] sm:$0xff]
    %v95 = vld [vmem:[#allocation2 + $0x50] sm:$0xff]
    %v96 = vld [vmem:[#allocation2 + $0x58] sm:$0xff]
    %v97 = vld [vmem:[#allocation2 + $0x60] sm:$0xff]
    %v98 = vld [vmem:[#allocation2 + $0x68] sm:$0xff]
    %v99 = vld [vmem:[#allocation2 + $0x70] sm:$0xff]
    %v100 = vld [vmem:[#allocation2 + $0x78] sm:$0xff]
    %v101 = vadd.f32 %v85, %v86
    %102 = vadd.xlane.f32.xlu0 %v101
    %v103 = vpop.xlane.xlu0 %102
    %v104 = vadd.f32 %v87, %v88
    %105 = vadd.xlane.f32.xlu0 %v104
    %v106 = vpop.xlane.xlu0 %105
    %v107 = vadd.f32 %v89, %v90
    %108 = vadd.xlane.f32.xlu0 %v107
    %v109 = vpop.xlane.xlu0 %108
    %v110 = vadd.f32 %v91, %v92
    %111 = vadd.xlane.f32.xlu0 %v110
    %v112 = vpop.xlane.xlu0 %111
    %v113 = vadd.f32 %v93, %v94
    %114 = vadd.xlane.f32.xlu0 %v113
    %v115 = vpop.xlane.xlu0 %114
    %v116 = vadd.f32 %v95, %v96
    %117 = vadd.xlane.f32.xlu0 %v116
    %v118 = vpop.xlane.xlu0 %117
    %v119 = vadd.f32 %v97, %v98
    %120 = vadd.xlane.f32.xlu0 %v119
    %v121 = vpop.xlane.xlu0 %120
    %v122 = vadd.f32 %v99, %v100
    %123 = vadd.xlane.f32.xlu0 %v122
    %v124 = vpop.xlane.xlu0 %123
    %v125 = vmul.f32 %v103, 0.00390625
    %v126 = vmul.f32 %v106, 0.00390625
    %v127 = vmul.f32 %v109, 0.00390625
    %v128 = vmul.f32 %v112, 0.00390625
    %v129 = vmul.f32 %v115, 0.00390625
    %v130 = vmul.f32 %v118, 0.00390625
    %v131 = vmul.f32 %v121, 0.00390625
    %v132 = vmul.f32 %v124, 0.00390625
    %v133 = vmax.f32 %v85, %v86
    %134 = vmax.xlane.f32.xlu0 %v133
    %v135 = vpop.xlane.xlu0 %134
    %v136 = vmax.f32 %v87, %v88
    %137 = vmax.xlane.f32.xlu0 %v136
    %v138 = vpop.xlane.xlu0 %137
    %v139 = vmax.f32 %v89, %v90
    %140 = vmax.xlane.f32.xlu0 %v139
    %v141 = vpop.xlane.xlu0 %140
    %v142 = vmax.f32 %v91, %v92
    %143 = vmax.xlane.f32.xlu0 %v142
    %v144 = vpop.xlane.xlu0 %143
    %v145 = vmax.f32 %v93, %v94
    %146 = vmax.xlane.f32.xlu0 %v145
    %v147 = vpop.xlane.xlu0 %146
    %v148 = vmax.f32 %v95, %v96
    %149 = vmax.xlane.f32.xlu0 %v148
    %v150 = vpop.xlane.xlu0 %149
    %v151 = vmax.f32 %v97, %v98
    %152 = vmax.xlane.f32.xlu0 %v151
    %v153 = vpop.xlane.xlu0 %152
    %v154 = vmax.f32 %v99, %v100
    %155 = vmax.xlane.f32.xlu0 %v154
    %v156 = vpop.xlane.xlu0 %155
    %v157 = vld [vmem:[#allocation5] sm:$0xff]
    %v158 = vld [vmem:[#allocation5 + $0x8] sm:$0xff]
    %v159 = vld [vmem:[#allocation5 + $0x10] sm:$0xff]
    %v160 = vld [vmem:[#allocation5 + $0x18] sm:$0xff]
    %v161 = vld [vmem:[#allocation5 + $0x20] sm:$0xff]
    %v162 = vld [vmem:[#allocation5 + $0x28] sm:$0xff]
    %v163 = vld [vmem:[#allocation5 + $0x30] sm:$0xff]
    %v164 = vld [vmem:[#allocation5 + $0x38] sm:$0xff]
    %v165 = vld [vmem:[#allocation5 + $0x40] sm:$0xff]
    %v166 = vld [vmem:[#allocation5 + $0x48] sm:$0xff]
    %v167 = vld [vmem:[#allocation5 + $0x50] sm:$0xff]
    %v168 = vld [vmem:[#allocation5 + $0x58] sm:$0xff]
    %v169 = vld [vmem:[#allocation5 + $0x60] sm:$0xff]
    %v170 = vld [vmem:[#allocation5 + $0x68] sm:$0xff]
    %v171 = vld [vmem:[#allocation5 + $0x70] sm:$0xff]
    %v172 = vld [vmem:[#allocation5 + $0x78] sm:$0xff]
    %v173 = vld [vmem:[#allocation7] sm:$0xff]
    %v174 = vld [vmem:[#allocation7 + $0x8] sm:$0xff]
    %v175 = vld [vmem:[#allocation7 + $0x10] sm:$0xff]
    %v176 = vld [vmem:[#allocation7 + $0x18] sm:$0xff]
    %v177 = vld [vmem:[#allocation7 + $0x20] sm:$0xff]
    %v178 = vld [vmem:[#allocation7 + $0x28] sm:$0xff]
    %v179 = vld [vmem:[#allocation7 + $0x30] sm:$0xff]
    %v180 = vld [vmem:[#allocation7 + $0x38] sm:$0xff]
    %v181 = vld [vmem:[#allocation7 + $0x40] sm:$0xff]
    %v182 = vld [vmem:[#allocation7 + $0x48] sm:$0xff]
    %v183 = vld [vmem:[#allocation7 + $0x50] sm:$0xff]
    %v184 = vld [vmem:[#allocation7 + $0x58] sm:$0xff]
    %v185 = vld [vmem:[#allocation7 + $0x60] sm:$0xff]
    %v186 = vld [vmem:[#allocation7 + $0x68] sm:$0xff]
    %v187 = vld [vmem:[#allocation7 + $0x70] sm:$0xff]
    %v188 = vld [vmem:[#allocation7 + $0x78] sm:$0xff]
    %v197 = vlaneseq
    %v198 = vand.u32 %v197, 127
    %v199 = vlaneseq
    %v200 = vshrl.u32 %v199, 7
    %v201 = vsub.s32 %v198, %v200
    %v202 = vrot.slane %v135, %v201
    %v203 = vadd.s32 %v198, 4294967288
    %v204 = vlaneseq
    %v205 = vshrl.u32 %v204, 7
    %v206 = vsub.s32 %v203, %v205
    %v207 = vrot.slane %v138, %v206
    %vm208 = vcmask 130112
    %v209 = vsel %vm208, %v207, %v202
    %v210 = vadd.s32 %v198, 4294967280
    %v211 = vlaneseq
    %v212 = vshrl.u32 %v211, 7
    %v213 = vsub.s32 %v210, %v212
    %v214 = vrot.slane %v141, %v213
    %vm215 = vcmask 195712
    %v216 = vsel %vm215, %v214, %v209
    %v217 = vadd.s32 %v198, 4294967272
    %v218 = vlaneseq
    %v219 = vshrl.u32 %v218, 7
    %v220 = vsub.s32 %v217, %v219
    %v221 = vrot.slane %v144, %v220
    %vm222 = vcmask 261312
    %v223 = vsel %vm222, %v221, %v216
    %v224 = vlaneseq
    %v225 = vshrl.u32 %v224, 7
    %v226 = vsub.s32 %v198, %v225
    %v227 = vrot.slane %v147, %v226
    %v228 = vlaneseq
    %v229 = vshrl.u32 %v228, 7
    %v230 = vsub.s32 %v203, %v229
    %v231 = vrot.slane %v150, %v230
    %v232 = vsel %vm208, %v231, %v227
    %v233 = vlaneseq
    %v234 = vshrl.u32 %v233, 7
    %v235 = vsub.s32 %v210, %v234
    %v236 = vrot.slane %v153, %v235
    %v237 = vsel %vm215, %v236, %v232
    %v238 = vlaneseq
    %v239 = vshrl.u32 %v238, 7
    %v240 = vsub.s32 %v217, %v239
    %v241 = vrot.slane %v156, %v240
    %v242 = vsel %vm222, %v241, %v237
    %vm243 = vcmask 1041409
    %v244 = vsel %vm243, %v242, %v223
    %vm245 = vcmask 261120
    %v246 = vsel %vm245, %v244, 0
    %248 = vmatprep.subr.mxu0 %v174
    %249 = vmatpush1.msra.mxu0 %v173
    %250 = vmatprep.subr.mxu0 %v178
    %251 = vmatpush1.msra.mxu0 %v177
    %252 = vmatprep.subr.mxu0 %v182
    %253 = vmatpush1.msra.mxu0 %v181
    %254 = vmatprep.subr.mxu0 %v186
    %255 = vmatpush1.msra.mxu0 %v185
    %256 = vmatprep.subr.mxu0 0.0
    %257 = vmatpush1.msra.mxu0 0.0
    %258 = vmatprep.subr.mxu0 0.0
    %259 = vmatpush1.msra.mxu0 0.0
    %260 = vmatprep.subr.mxu0 0.0
    %261 = vmatpush1.msra.mxu0 0.0
    %262 = vmatprep.subr.mxu0 0.0
    %263 = vmatpush1.msra.mxu0 0.0
    %264 = vmatprep.subr.mxu0 0.0
    %265 = vmatpush1.msra.mxu0 0.0
    %266 = vmatprep.subr.mxu0 0.0
    %267 = vmatpush1.msra.mxu0 0.0
    %268 = vmatprep.subr.mxu0 0.0
    %269 = vmatpush1.msra.mxu0 0.0
    %270 = vmatprep.subr.mxu0 0.0
    %271 = vmatpush1.msra.mxu0 0.0
    %272 = vmatprep.subr.mxu0 0.0
    %273 = vmatpush1.msra.mxu0 0.0
    %274 = vmatprep.subr.mxu0 0.0
    %275 = vmatpush1.msra.mxu0 0.0
    %276 = vmatprep.subr.mxu0 0.0
    %277 = vmatpush1.msra.mxu0 0.0
    %278 = vmatprep.subr.mxu0 0.0
    %279 = vmatpush1.msra.mxu0 0.0
    %280 = vmatprep.subr.mxu0 0.0
    %281 = vmatpush1.msra.mxu0 0.0
    %282 = vmatprep.subr.mxu0 0.0
    %283 = vmatpush1.msra.mxu0 0.0
    %284 = vmatprep.subr.mxu0 0.0
    %285 = vmatpush1.msra.mxu0 0.0
    %286 = vmatprep.subr.mxu0 0.0
    %287 = vmatpush1.msra.mxu0 0.0
    %288 = vmatprep.subr.mxu0 0.0
    %289 = vmatpush1.msra.mxu0 0.0
    %290 = vmatprep.subr.mxu0 0.0
    %291 = vmatpush1.msra.mxu0 0.0
    %292 = vmatprep.subr.mxu0 0.0
    %293 = vmatpush1.msra.mxu0 0.0
    %294 = vmatprep.subr.mxu0 0.0
    %295 = vmatpush1.msra.mxu0 0.0
    %296 = vmatprep.subr.mxu0 0.0
    %297 = vmatpush1.msra.mxu0 0.0
    %298 = vmatprep.subr.mxu0 0.0
    %299 = vmatpush1.msra.mxu0 0.0
    %300 = vmatprep.subr.mxu0 0.0
    %301 = vmatpush1.msra.mxu0 0.0
    %302 = vmatprep.subr.mxu0 0.0
    %303 = vmatpush1.msra.mxu0 0.0
    %304 = vmatprep.subr.mxu0 0.0
    %305 = vmatpush1.msra.mxu0 0.0
    %306 = vmatprep.subr.mxu0 0.0
    %307 = vmatpush1.msra.mxu0 0.0
    %308 = vmatprep.subr.mxu0 0.0
    %309 = vmatpush1.msra.mxu0 0.0
    %310 = vmatprep.subr.mxu0 0.0
    %311 = vmatpush1.msra.mxu0 0.0
    %312 = vmatprep.mubr.f32.mxu0 0.0
    %313 = vmatmul.mubr.f32.gmra.mrb[0].mxu0 %v246
    %v314 = vpop.f32.mrb[0].mxu0
    %v315 = vadd.f32 0.0, %v314
    %v316 = vpop.f32.mrb[0].mxu0
    %v317 = vadd.f32 0.0, %v316
    %318 = vdwg.mxu0
    %319 = vmatprep.subr.mxu0 %v176
    %320 = vmatpush1.msra.mxu0 %v175
    %321 = vmatprep.subr.mxu0 %v180
    %322 = vmatpush1.msra.mxu0 %v179
    %323 = vmatprep.subr.mxu0 %v184
    %324 = vmatpush1.msra.mxu0 %v183
    %325 = vmatprep.subr.mxu0 %v188
    %326 = vmatpush1.msra.mxu0 %v187
    %327 = vmatprep.subr.mxu0 0.0
    %328 = vmatpush1.msra.mxu0 0.0
    %329 = vmatprep.subr.mxu0 0.0
    %330 = vmatpush1.msra.mxu0 0.0
    %331 = vmatprep.subr.mxu0 0.0
    %332 = vmatpush1.msra.mxu0 0.0
    %333 = vmatprep.subr.mxu0 0.0
    %334 = vmatpush1.msra.mxu0 0.0
    %335 = vmatprep.subr.mxu0 0.0
    %336 = vmatpush1.msra.mxu0 0.0
    %337 = vmatprep.subr.mxu0 0.0
    %338 = vmatpush1.msra.mxu0 0.0
    %339 = vmatprep.subr.mxu0 0.0
    %340 = vmatpush1.msra.mxu0 0.0
    %341 = vmatprep.subr.mxu0 0.0
    %342 = vmatpush1.msra.mxu0 0.0
    %343 = vmatprep.subr.mxu0 0.0
    %344 = vmatpush1.msra.mxu0 0.0
    %345 = vmatprep.subr.mxu0 0.0
    %346 = vmatpush1.msra.mxu0 0.0
    %347 = vmatprep.subr.mxu0 0.0
    %348 = vmatpush1.msra.mxu0 0.0
    %349 = vmatprep.subr.mxu0 0.0
    %350 = vmatpush1.msra.mxu0 0.0
    %351 = vmatprep.subr.mxu0 0.0
    %352 = vmatpush1.msra.mxu0 0.0
    %353 = vmatprep.subr.mxu0 0.0
    %354 = vmatpush1.msra.mxu0 0.0
    %355 = vmatprep.subr.mxu0 0.0
    %356 = vmatpush1.msra.mxu0 0.0
    %357 = vmatprep.subr.mxu0 0.0
    %358 = vmatpush1.msra.mxu0 0.0
    %359 = vmatprep.subr.mxu0 0.0
    %360 = vmatpush1.msra.mxu0 0.0
    %361 = vmatprep.subr.mxu0 0.0
    %362 = vmatpush1.msra.mxu0 0.0
    %363 = vmatprep.subr.mxu0 0.0
    %364 = vmatpush1.msra.mxu0 0.0
    %365 = vmatprep.subr.mxu0 0.0
    %366 = vmatpush1.msra.mxu0 0.0
    %367 = vmatprep.subr.mxu0 0.0
    %368 = vmatpush1.msra.mxu0 0.0
    %369 = vmatprep.subr.mxu0 0.0
    %370 = vmatpush1.msra.mxu0 0.0
    %371 = vmatprep.subr.mxu0 0.0
    %372 = vmatpush1.msra.mxu0 0.0
    %373 = vmatprep.subr.mxu0 0.0
    %374 = vmatpush1.msra.mxu0 0.0
    %375 = vmatprep.subr.mxu0 0.0
    %376 = vmatpush1.msra.mxu0 0.0
    %377 = vmatprep.subr.mxu0 0.0
    %378 = vmatpush1.msra.mxu0 0.0
    %379 = vmatprep.subr.mxu0 0.0
    %380 = vmatpush1.msra.mxu0 0.0
    %381 = vmatprep.subr.mxu0 0.0
    %382 = vmatpush1.msra.mxu0 0.0
    %383 = vmatprep.mubr.f32.mxu0 0.0
    %384 = vmatmul.mubr.f32.gmra.mrb[0].mxu0 %v246
    %v385 = vpop.f32.mrb[0].mxu0
    %v386 = vadd.f32 0.0, %v385
    %v387 = vpop.f32.mrb[0].mxu0
    %v388 = vadd.f32 0.0, %v387
    %389 = vdwg.mxu0
    %v398 = vlaneseq
    %v399 = vshrl.u32 %v398, 7
    %v400 = vsub.s32 %v198, %v399
    %v401 = vrot.slane %v125, %v400
    %v402 = vlaneseq
    %v403 = vshrl.u32 %v402, 7
    %v404 = vsub.s32 %v203, %v403
    %v405 = vrot.slane %v126, %v404
    %v406 = vsel %vm208, %v405, %v401
    %v407 = vlaneseq
    %v408 = vshrl.u32 %v407, 7
    %v409 = vsub.s32 %v210, %v408
    %v410 = vrot.slane %v127, %v409
    %v411 = vsel %vm215, %v410, %v406
    %v412 = vlaneseq
    %v413 = vshrl.u32 %v412, 7
    %v414 = vsub.s32 %v217, %v413
    %v415 = vrot.slane %v128, %v414
    %v416 = vsel %vm222, %v415, %v411
    %v417 = vlaneseq
    %v418 = vshrl.u32 %v417, 7
    %v419 = vsub.s32 %v198, %v418
    %v420 = vrot.slane %v129, %v419
    %v421 = vlaneseq
    %v422 = vshrl.u32 %v421, 7
    %v423 = vsub.s32 %v203, %v422
    %v424 = vrot.slane %v130, %v423
    %v425 = vsel %vm208, %v424, %v420
    %v426 = vlaneseq
    %v427 = vshrl.u32 %v426, 7
    %v428 = vsub.s32 %v210, %v427
    %v429 = vrot.slane %v131, %v428
    %v430 = vsel %vm215, %v429, %v425
    %v431 = vlaneseq
    %v432 = vshrl.u32 %v431, 7
    %v433 = vsub.s32 %v217, %v432
    %v434 = vrot.slane %v132, %v433
    %v435 = vsel %vm222, %v434, %v430
    %v436 = vsel %vm243, %v435, %v416
    %v437 = vsel %vm245, %v436, 0
    %439 = vmatprep.subr.mxu0 %v158
    %440 = vmatpush1.msra.mxu0 %v157
    %441 = vmatprep.subr.mxu0 %v162
    %442 = vmatpush1.msra.mxu0 %v161
    %443 = vmatprep.subr.mxu0 %v166
    %444 = vmatpush1.msra.mxu0 %v165
    %445 = vmatprep.subr.mxu0 %v170
    %446 = vmatpush1.msra.mxu0 %v169
    %447 = vmatprep.subr.mxu0 0.0
    %448 = vmatpush1.msra.mxu0 0.0
    %449 = vmatprep.subr.mxu0 0.0
    %450 = vmatpush1.msra.mxu0 0.0
    %451 = vmatprep.subr.mxu0 0.0
    %452 = vmatpush1.msra.mxu0 0.0
    %453 = vmatprep.subr.mxu0 0.0
    %454 = vmatpush1.msra.mxu0 0.0
    %455 = vmatprep.subr.mxu0 0.0
    %456 = vmatpush1.msra.mxu0 0.0
    %457 = vmatprep.subr.mxu0 0.0
    %458 = vmatpush1.msra.mxu0 0.0
    %459 = vmatprep.subr.mxu0 0.0
    %460 = vmatpush1.msra.mxu0 0.0
    %461 = vmatprep.subr.mxu0 0.0
    %462 = vmatpush1.msra.mxu0 0.0
    %463 = vmatprep.subr.mxu0 0.0
    %464 = vmatpush1.msra.mxu0 0.0
    %465 = vmatprep.subr.mxu0 0.0
    %466 = vmatpush1.msra.mxu0 0.0
    %467 = vmatprep.subr.mxu0 0.0
    %468 = vmatpush1.msra.mxu0 0.0
    %469 = vmatprep.subr.mxu0 0.0
    %470 = vmatpush1.msra.mxu0 0.0
    %471 = vmatprep.subr.mxu0 0.0
    %472 = vmatpush1.msra.mxu0 0.0
    %473 = vmatprep.subr.mxu0 0.0
    %474 = vmatpush1.msra.mxu0 0.0
    %475 = vmatprep.subr.mxu0 0.0
    %476 = vmatpush1.msra.mxu0 0.0
    %477 = vmatprep.subr.mxu0 0.0
    %478 = vmatpush1.msra.mxu0 0.0
    %479 = vmatprep.subr.mxu0 0.0
    %480 = vmatpush1.msra.mxu0 0.0
    %481 = vmatprep.subr.mxu0 0.0
    %482 = vmatpush1.msra.mxu0 0.0
    %483 = vmatprep.subr.mxu0 0.0
    %484 = vmatpush1.msra.mxu0 0.0
    %485 = vmatprep.subr.mxu0 0.0
    %486 = vmatpush1.msra.mxu0 0.0
    %487 = vmatprep.subr.mxu0 0.0
    %488 = vmatpush1.msra.mxu0 0.0
    %489 = vmatprep.subr.mxu0 0.0
    %490 = vmatpush1.msra.mxu0 0.0
    %491 = vmatprep.subr.mxu0 0.0
    %492 = vmatpush1.msra.mxu0 0.0
    %493 = vmatprep.subr.mxu0 0.0
    %494 = vmatpush1.msra.mxu0 0.0
    %495 = vmatprep.subr.mxu0 0.0
    %496 = vmatpush1.msra.mxu0 0.0
    %497 = vmatprep.subr.mxu0 0.0
    %498 = vmatpush1.msra.mxu0 0.0
    %499 = vmatprep.subr.mxu0 0.0
    %500 = vmatpush1.msra.mxu0 0.0
    %501 = vmatprep.subr.mxu0 0.0
    %502 = vmatpush1.msra.mxu0 0.0
    %503 = vmatprep.mubr.f32.mxu0 0.0
    %504 = vmatmul.mubr.f32.gmra.mrb[0].mxu0 %v437
    %v505 = vpop.f32.mrb[0].mxu0
    %v506 = vadd.f32 %v315, %v505
    %v507 = vpop.f32.mrb[0].mxu0
    %v508 = vadd.f32 %v317, %v507
    %509 = vdwg.mxu0
    %510 = vmatprep.subr.mxu0 %v160
    %511 = vmatpush1.msra.mxu0 %v159
    %512 = vmatprep.subr.mxu0 %v164
    %513 = vmatpush1.msra.mxu0 %v163
    %514 = vmatprep.subr.mxu0 %v168
    %515 = vmatpush1.msra.mxu0 %v167
    %516 = vmatprep.subr.mxu0 %v172
    %517 = vmatpush1.msra.mxu0 %v171
    %518 = vmatprep.subr.mxu0 0.0
    %519 = vmatpush1.msra.mxu0 0.0
    %520 = vmatprep.subr.mxu0 0.0
    %521 = vmatpush1.msra.mxu0 0.0
    %522 = vmatprep.subr.mxu0 0.0
    %523 = vmatpush1.msra.mxu0 0.0
    %524 = vmatprep.subr.mxu0 0.0
    %525 = vmatpush1.msra.mxu0 0.0
    %526 = vmatprep.subr.mxu0 0.0
    %527 = vmatpush1.msra.mxu0 0.0
    %528 = vmatprep.subr.mxu0 0.0
    %529 = vmatpush1.msra.mxu0 0.0
    %530 = vmatprep.subr.mxu0 0.0
    %531 = vmatpush1.msra.mxu0 0.0
    %532 = vmatprep.subr.mxu0 0.0
    %533 = vmatpush1.msra.mxu0 0.0
    %534 = vmatprep.subr.mxu0 0.0
    %535 = vmatpush1.msra.mxu0 0.0
    %536 = vmatprep.subr.mxu0 0.0
    %537 = vmatpush1.msra.mxu0 0.0
    %538 = vmatprep.subr.mxu0 0.0
    %539 = vmatpush1.msra.mxu0 0.0
    %540 = vmatprep.subr.mxu0 0.0
    %541 = vmatpush1.msra.mxu0 0.0
    %542 = vmatprep.subr.mxu0 0.0
    %543 = vmatpush1.msra.mxu0 0.0
    %544 = vmatprep.subr.mxu0 0.0
    %545 = vmatpush1.msra.mxu0 0.0
    %546 = vmatprep.subr.mxu0 0.0
    %547 = vmatpush1.msra.mxu0 0.0
    %548 = vmatprep.subr.mxu0 0.0
    %549 = vmatpush1.msra.mxu0 0.0
    %550 = vmatprep.subr.mxu0 0.0
    %551 = vmatpush1.msra.mxu0 0.0
    %552 = vmatprep.subr.mxu0 0.0
    %553 = vmatpush1.msra.mxu0 0.0
    %554 = vmatprep.subr.mxu0 0.0
    %555 = vmatpush1.msra.mxu0 0.0
    %556 = vmatprep.subr.mxu0 0.0
    %557 = vmatpush1.msra.mxu0 0.0
    %558 = vmatprep.subr.mxu0 0.0
    %559 = vmatpush1.msra.mxu0 0.0
    %560 = vmatprep.subr.mxu0 0.0
    %561 = vmatpush1.msra.mxu0 0.0
    %562 = vmatprep.subr.mxu0 0.0
    %563 = vmatpush1.msra.mxu0 0.0
    %564 = vmatprep.subr.mxu0 0.0
    %565 = vmatpush1.msra.mxu0 0.0
    %566 = vmatprep.subr.mxu0 0.0
    %567 = vmatpush1.msra.mxu0 0.0
    %568 = vmatprep.subr.mxu0 0.0
    %569 = vmatpush1.msra.mxu0 0.0
    %570 = vmatprep.subr.mxu0 0.0
    %571 = vmatpush1.msra.mxu0 0.0
    %572 = vmatprep.subr.mxu0 0.0
    %573 = vmatpush1.msra.mxu0 0.0
    %574 = vmatprep.mubr.f32.mxu0 0.0
    %575 = vmatmul.mubr.f32.gmra.mrb[0].mxu0 %v437
    %v576 = vpop.f32.mrb[0].mxu0
    %v577 = vadd.f32 %v386, %v576
    %v578 = vpop.f32.mrb[0].mxu0
    %v579 = vadd.f32 %v388, %v578
    %580 = vdwg.mxu0
    %v581 = vld [vmem:[%s3] sm:$0xf]
    %v583 = vlaneseq
    %v584 = vshrl.u32 %v583, 7
    %v585 = vsub.s32 0, %v584
    %v586 = vrot.slane %v581, %v585
    %v587 = vlaneseq
    %v588 = vshrl.u32 %v587, 7
    %v589 = vsub.s32 1, %v588
    %v590 = vrot.slane %v581, %v589
    %v591 = vlaneseq
    %v592 = vshrl.u32 %v591, 7
    %v593 = vsub.s32 2, %v592
    %v594 = vrot.slane %v581, %v593
    %v595 = vlaneseq
    %v596 = vshrl.u32 %v595, 7
    %v597 = vsub.s32 3, %v596
    %v598 = vrot.slane %v581, %v597
    %v603 = vadd.f32 %v506, %v586
    %v604 = vadd.f32 %v508, %v590
    %v605 = vadd.f32 %v577, %v594
    %v606 = vadd.f32 %v579, %v598
    %v607 = vmax.f32 %v603, 0.0
    %v608 = vmax.f32 %v604, 0.0
    %v609 = vmax.f32 %v605, 0.0
    %v610 = vmax.f32 %v606, 0.0
    %v611 = vld [vmem:[#allocation8] sm:$0xff]
    %v612 = vld [vmem:[#allocation8 + $0x8] sm:$0xff]
    %v613 = vld [vmem:[#allocation8 + $0x10] sm:$0xff]
    %v614 = vld [vmem:[#allocation8 + $0x18] sm:$0xff]
    %v615 = vld [vmem:[#allocation8 + $0x20] sm:$0xff]
    %v616 = vld [vmem:[#allocation8 + $0x28] sm:$0xff]
    %v617 = vld [vmem:[#allocation8 + $0x30] sm:$0xff]
    %v618 = vld [vmem:[#allocation8 + $0x38] sm:$0xff]
    %v619 = vld [vmem:[#allocation8 + $0x40] sm:$0xff]
    %v620 = vld [vmem:[#allocation8 + $0x48] sm:$0xff]
    %v621 = vld [vmem:[#allocation8 + $0x50] sm:$0xff]
    %v622 = vld [vmem:[#allocation8 + $0x58] sm:$0xff]
    %v623 = vld [vmem:[#allocation8 + $0x60] sm:$0xff]
    %v624 = vld [vmem:[#allocation8 + $0x68] sm:$0xff]
    %v625 = vld [vmem:[#allocation8 + $0x70] sm:$0xff]
    %v626 = vld [vmem:[#allocation8 + $0x78] sm:$0xff]
    %v627 = vld [vmem:[#allocation8 + $0x80] sm:$0xff]
    %v628 = vld [vmem:[#allocation8 + $0x88] sm:$0xff]
    %v629 = vld [vmem:[#allocation8 + $0x90] sm:$0xff]
    %v630 = vld [vmem:[#allocation8 + $0x98] sm:$0xff]
    %v631 = vld [vmem:[#allocation8 + $0xa0] sm:$0xff]
    %v632 = vld [vmem:[#allocation8 + $0xa8] sm:$0xff]
    %v633 = vld [vmem:[#allocation8 + $0xb0] sm:$0xff]
    %v634 = vld [vmem:[#allocation8 + $0xb8] sm:$0xff]
    %v635 = vld [vmem:[#allocation8 + $0xc0] sm:$0xff]
    %v636 = vld [vmem:[#allocation8 + $0xc8] sm:$0xff]
    %v637 = vld [vmem:[#allocation8 + $0xd0] sm:$0xff]
    %v638 = vld [vmem:[#allocation8 + $0xd8] sm:$0xff]
    %v639 = vld [vmem:[#allocation8 + $0xe0] sm:$0xff]
    %v640 = vld [vmem:[#allocation8 + $0xe8] sm:$0xff]
    %v641 = vld [vmem:[#allocation8 + $0xf0] sm:$0xff]
    %v642 = vld [vmem:[#allocation8 + $0xf8] sm:$0xff]
    %v643 = vld [vmem:[#allocation8 + $0x100] sm:$0xff]
    %v644 = vld [vmem:[#allocation8 + $0x108] sm:$0xff]
    %v645 = vld [vmem:[#allocation8 + $0x110] sm:$0xff]
    %v646 = vld [vmem:[#allocation8 + $0x118] sm:$0xff]
    %v647 = vld [vmem:[#allocation8 + $0x120] sm:$0xff]
    %v648 = vld [vmem:[#allocation8 + $0x128] sm:$0xff]
    %v649 = vld [vmem:[#allocation8 + $0x130] sm:$0xff]
    %v650 = vld [vmem:[#allocation8 + $0x138] sm:$0xff]
    %v651 = vld [vmem:[#allocation8 + $0x140] sm:$0xff]
    %v652 = vld [vmem:[#allocation8 + $0x148] sm:$0xff]
    %v653 = vld [vmem:[#allocation8 + $0x150] sm:$0xff]
    %v654 = vld [vmem:[#allocation8 + $0x158] sm:$0xff]
    %v655 = vld [vmem:[#allocation8 + $0x160] sm:$0xff]
    %v656 = vld [vmem:[#allocation8 + $0x168] sm:$0xff]
    %v657 = vld [vmem:[#allocation8 + $0x170] sm:$0xff]
    %v658 = vld [vmem:[#allocation8 + $0x178] sm:$0xff]
    %v659 = vld [vmem:[#allocation8 + $0x180] sm:$0xff]
    %v660 = vld [vmem:[#allocation8 + $0x188] sm:$0xff]
    %v661 = vld [vmem:[#allocation8 + $0x190] sm:$0xff]
    %v662 = vld [vmem:[#allocation8 + $0x198] sm:$0xff]
    %v663 = vld [vmem:[#allocation8 + $0x1a0] sm:$0xff]
    %v664 = vld [vmem:[#allocation8 + $0x1a8] sm:$0xff]
    %v665 = vld [vmem:[#allocation8 + $0x1b0] sm:$0xff]
    %v666 = vld [vmem:[#allocation8 + $0x1b8] sm:$0xff]
    %v667 = vld [vmem:[#allocation8 + $0x1c0] sm:$0xff]
    %v668 = vld [vmem:[#allocation8 + $0x1c8] sm:$0xff]
    %v669 = vld [vmem:[#allocation8 + $0x1d0] sm:$0xff]
    %v670 = vld [vmem:[#allocation8 + $0x1d8] sm:$0xff]
    %v671 = vld [vmem:[#allocation8 + $0x1e0] sm:$0xff]
    %v672 = vld [vmem:[#allocation8 + $0x1e8] sm:$0xff]
    %v673 = vld [vmem:[#allocation8 + $0x1f0] sm:$0xff]
    %v674 = vld [vmem:[#allocation8 + $0x1f8] sm:$0xff]
    %v675 = vld [vmem:[%s5] sm:$0x1]
    %v677 = vlaneseq
    %v678 = vshrl.u32 %v677, 7
    %v679 = vsub.s32 0, %v678
    %v680 = vrot.slane %v675, %v679
    %682 = vmatprep.subr.mxu0 0.0
    %683 = vmatpush1.msra.mxu0 %v611
    %684 = vmatprep.subr.mxu0 0.0
    %685 = vmatpush1.msra.mxu0 %v612
    %686 = vmatprep.subr.mxu0 0.0
    %687 = vmatpush1.msra.mxu0 %v613
    %688 = vmatprep.subr.mxu0 0.0
    %689 = vmatpush1.msra.mxu0 %v614
    %690 = vmatprep.subr.mxu0 0.0
    %691 = vmatpush1.msra.mxu0 %v615
    %692 = vmatprep.subr.mxu0 0.0
    %693 = vmatpush1.msra.mxu0 %v616
    %694 = vmatprep.subr.mxu0 0.0
    %695 = vmatpush1.msra.mxu0 %v617
    %696 = vmatprep.subr.mxu0 0.0
    %697 = vmatpush1.msra.mxu0 %v618
    %698 = vmatprep.subr.mxu0 0.0
    %699 = vmatpush1.msra.mxu0 %v619
    %700 = vmatprep.subr.mxu0 0.0
    %701 = vmatpush1.msra.mxu0 %v620
    %702 = vmatprep.subr.mxu0 0.0
    %703 = vmatpush1.msra.mxu0 %v621
    %704 = vmatprep.subr.mxu0 0.0
    %705 = vmatpush1.msra.mxu0 %v622
    %706 = vmatprep.subr.mxu0 0.0
    %707 = vmatpush1.msra.mxu0 %v623
    %708 = vmatprep.subr.mxu0 0.0
    %709 = vmatpush1.msra.mxu0 %v624
    %710 = vmatprep.subr.mxu0 0.0
    %711 = vmatpush1.msra.mxu0 %v625
    %712 = vmatprep.subr.mxu0 0.0
    %713 = vmatpush1.msra.mxu0 %v626
    %714 = vmatprep.subr.mxu0 0.0
    %715 = vmatpush1.msra.mxu0 %v627
    %716 = vmatprep.subr.mxu0 0.0
    %717 = vmatpush1.msra.mxu0 %v628
    %718 = vmatprep.subr.mxu0 0.0
    %719 = vmatpush1.msra.mxu0 %v629
    %720 = vmatprep.subr.mxu0 0.0
    %721 = vmatpush1.msra.mxu0 %v630
    %722 = vmatprep.subr.mxu0 0.0
    %723 = vmatpush1.msra.mxu0 %v631
    %724 = vmatprep.subr.mxu0 0.0
    %725 = vmatpush1.msra.mxu0 %v632
    %726 = vmatprep.subr.mxu0 0.0
    %727 = vmatpush1.msra.mxu0 %v633
    %728 = vmatprep.subr.mxu0 0.0
    %729 = vmatpush1.msra.mxu0 %v634
    %730 = vmatprep.subr.mxu0 0.0
    %731 = vmatpush1.msra.mxu0 %v635
    %732 = vmatprep.subr.mxu0 0.0
    %733 = vmatpush1.msra.mxu0 %v636
    %734 = vmatprep.subr.mxu0 0.0
    %735 = vmatpush1.msra.mxu0 %v637
    %736 = vmatprep.subr.mxu0 0.0
    %737 = vmatpush1.msra.mxu0 %v638
    %738 = vmatprep.subr.mxu0 0.0
    %739 = vmatpush1.msra.mxu0 %v639
    %740 = vmatprep.subr.mxu0 0.0
    %741 = vmatpush1.msra.mxu0 %v640
    %742 = vmatprep.subr.mxu0 0.0
    %743 = vmatpush1.msra.mxu0 %v641
    %744 = vmatprep.subr.mxu0 0.0
    %745 = vmatpush1.msra.mxu0 %v642
    %746 = vmatprep.mubr.f32.mxu0 %v608
    %747 = vmatmul.mubr.f32.gmra.mrb[0].mxu0 %v607
    %v748 = vpop.f32.mrb[0].mxu0
    %v749 = vadd.f32 %v680, %v748
    %v750 = vpop.f32.mrb[0].mxu0
    %751 = vdwg.mxu0
    %752 = vmatprep.subr.mxu0 0.0
    %753 = vmatpush1.msra.mxu0 %v643
    %754 = vmatprep.subr.mxu0 0.0
    %755 = vmatpush1.msra.mxu0 %v644
    %756 = vmatprep.subr.mxu0 0.0
    %757 = vmatpush1.msra.mxu0 %v645
    %758 = vmatprep.subr.mxu0 0.0
    %759 = vmatpush1.msra.mxu0 %v646
    %760 = vmatprep.subr.mxu0 0.0
    %761 = vmatpush1.msra.mxu0 %v647
    %762 = vmatprep.subr.mxu0 0.0
    %763 = vmatpush1.msra.mxu0 %v648
    %764 = vmatprep.subr.mxu0 0.0
    %765 = vmatpush1.msra.mxu0 %v649
    %766 = vmatprep.subr.mxu0 0.0
    %767 = vmatpush1.msra.mxu0 %v650
    %768 = vmatprep.subr.mxu0 0.0
    %769 = vmatpush1.msra.mxu0 %v651
    %770 = vmatprep.subr.mxu0 0.0
    %771 = vmatpush1.msra.mxu0 %v652
    %772 = vmatprep.subr.mxu0 0.0
    %773 = vmatpush1.msra.mxu0 %v653
    %774 = vmatprep.subr.mxu0 0.0
    %775 = vmatpush1.msra.mxu0 %v654
    %776 = vmatprep.subr.mxu0 0.0
    %777 = vmatpush1.msra.mxu0 %v655
    %778 = vmatprep.subr.mxu0 0.0
    %779 = vmatpush1.msra.mxu0 %v656
    %780 = vmatprep.subr.mxu0 0.0
    %781 = vmatpush1.msra.mxu0 %v657
    %782 = vmatprep.subr.mxu0 0.0
    %783 = vmatpush1.msra.mxu0 %v658
    %784 = vmatprep.subr.mxu0 0.0
    %785 = vmatpush1.msra.mxu0 %v659
    %786 = vmatprep.subr.mxu0 0.0
    %787 = vmatpush1.msra.mxu0 %v660
    %788 = vmatprep.subr.mxu0 0.0
    %789 = vmatpush1.msra.mxu0 %v661
    %790 = vmatprep.subr.mxu0 0.0
    %791 = vmatpush1.msra.mxu0 %v662
    %792 = vmatprep.subr.mxu0 0.0
    %793 = vmatpush1.msra.mxu0 %v663
    %794 = vmatprep.subr.mxu0 0.0
    %795 = vmatpush1.msra.mxu0 %v664
    %796 = vmatprep.subr.mxu0 0.0
    %797 = vmatpush1.msra.mxu0 %v665
    %798 = vmatprep.subr.mxu0 0.0
    %799 = vmatpush1.msra.mxu0 %v666
    %800 = vmatprep.subr.mxu0 0.0
    %801 = vmatpush1.msra.mxu0 %v667
    %802 = vmatprep.subr.mxu0 0.0
    %803 = vmatpush1.msra.mxu0 %v668
    %804 = vmatprep.subr.mxu0 0.0
    %805 = vmatpush1.msra.mxu0 %v669
    %806 = vmatprep.subr.mxu0 0.0
    %807 = vmatpush1.msra.mxu0 %v670
    %808 = vmatprep.subr.mxu0 0.0
    %809 = vmatpush1.msra.mxu0 %v671
    %810 = vmatprep.subr.mxu0 0.0
    %811 = vmatpush1.msra.mxu0 %v672
    %812 = vmatprep.subr.mxu0 0.0
    %813 = vmatpush1.msra.mxu0 %v673
    %814 = vmatprep.subr.mxu0 0.0
    %815 = vmatpush1.msra.mxu0 %v674
    %816 = vmatprep.mubr.f32.mxu0 %v610
    %817 = vmatmul.mubr.f32.gmra.mrb[0].mxu0 %v609
    %v818 = vpop.f32.mrb[0].mxu0
    %v819 = vadd.f32 %v749, %v818
    %v820 = vpop.f32.mrb[0].mxu0
    %821 = vdwg.mxu0
    %822 = vst [vmem:[#allocation10] sm:$0x3] %v819
    %v823 = vld [vmem:[%s6] sm:$0x1]
    %v824 = vunpack.c.l.bf16 %v823
    %v825 = vmax.f32 %v819, 0.0
    %v826 = vmul.f32 %v819, %v824
    %v827 = vsub.f32 %v825, %v826
    %v828 = vand.u32 2147483647, %v819
    %v829 = vsub.f32 0.0, %v828
    %v830 = vmul.f32 %v829, 1.442695
    %v831 = vpow.pop %v830
    %v832 = vadd.f32 %v831, 1.0
    %v833 = vlog2.pop %v832
    %v834 = vmul.f32 %v833, 0.6931472
    %v835 = vmul.f32 -0.5, %v831
    %v836 = vadd.f32 %v835, 1.0
    %v837 = vmul.f32 %v836, %v831
    %v838 = vand.u32 2147483647, %v831
    %vm839 = vcmp.lt.f32.partialorder %v838, 0.0004427343
    %v840 = vsel %vm839, %v837, %v834
    %v841 = vadd.f32 %v827, %v840
    %vm842 = vcmp.lt.s32.totalorder %v198, 8
    %v843 = vsel %vm842, %v841, 0.0
    %vm844 = vcmask 1041408
    %v845 = vsel %vm844, %v843, 0.0
    %v846 = vrot.slane %v845, 4
    %v847 = vadd.f32 %v845, %v846
    %v848 = vrot.slane %v847, 2
    %v849 = vadd.f32 %v847, %v848
    %v850 = vrot.slane %v849, 1
    %v851 = vadd.f32 %v849, %v850
    %852 = vst [vmem:[#allocation11] sm:$0x1] %v851
    // Predicated region
    $region46: #{tpu_custom_call.1} parent=1 // pred_check
      _
    $region47: #{tpu_custom_call.1} parent=1 // pred_check_branch
      %854 = sbr.rel (0) target = $region49
    $region48: #{tpu_custom_call.1} parent=1 // pred_region
      %s856 = ssub.s32 32, 32
      %857 = vsyncadd [#allocation4], %s856
      %s859 = sshll.u32 [#allocation10], 4
      %s860 = int_to_ptr.vmem [resolvable:$true] %s859
      %862 = dma.vmem_to_hbm [thread:$0]  %s860, 32, %s7, [#allocation4]
    $region49: #{tpu_custom_call.1} parent=1 // pred_fallthru
      _
    // Predicated region
    $region50: #{tpu_custom_call.1} parent=1 // pred_check
      _
    $region51: #{tpu_custom_call.1} parent=1 // pred_check_branch
      %864 = sbr.rel (0) target = $region53
    $region52: #{tpu_custom_call.1} parent=1 // pred_region
      %s866 = ssub.s32 16, 16
      %867 = vsyncadd [#allocation12], %s866
      %s869 = sshll.u32 [#allocation11], 4
      %s870 = int_to_ptr.vmem [resolvable:$true] %s869
      %872 = dma.vmem_to_hbm [thread:$0]  %s870, 16, %s8, [#allocation12]
    $region53: #{tpu_custom_call.1} parent=1 // pred_fallthru
      _
    // Predicated region
    $region54: #{tpu_custom_call.1} parent=1 // pred_check
      _
    $region55: #{tpu_custom_call.1} parent=1 // pred_check_branch
      %874 = sbr.rel (0) target = $region57
    $region56: #{tpu_custom_call.1} parent=1 // pred_region
      %875 = dma.done [#allocation4], 32
    $region57: #{tpu_custom_call.1} parent=1 // pred_fallthru
      _
    // Predicated region
    $region58: #{tpu_custom_call.1} parent=1 // pred_check
      _
    $region59: #{tpu_custom_call.1} parent=1 // pred_check_branch
      %877 = sbr.rel (0) target = $region61
    $region60: #{tpu_custom_call.1} parent=1 // pred_region
      %878 = dma.done [#allocation12], 16
    $region61: #{tpu_custom_call.1} parent=1 // pred_fallthru
      _
    %879 = vsyncpa [#allocation3], 1
    %880 = vsyncpa [#allocation6], 1
    %881 = vsyncpa [#allocation9], 1
    %882 = vsyncpa [#allocation4], 1
    %883 = vsyncpa [#allocation12], 1

</llo_original>
